<compile_context>
chip_gen: v6e
topology: v6e:2x2x1
jax: 0.10.0
libtpu: 0.0.40
codegen_flags: <defaults>
</compile_context>

<pallas_src>
import functools

import jax
import jax.numpy as jnp
from jax.experimental import pallas as pl
from jax.experimental.pallas import tpu as pltpu

INPUT_DIM = 512
HIDDEN_DIM = 384
OUTPUT_DIM = 256
BN_EPS = 1e-5


def _stats_kernel(x_ref, w1_ref, psum_ref, psq_ref, *, n_rows, tile_m,
                  mask_tail):
    """Pass 1: per-tile column sum and sum-of-squares of h = x @ W1."""
    h = jnp.dot(x_ref[...], w1_ref[...], preferred_element_type=jnp.float32)
    if mask_tail:
        # Last tile may read past the end of x (no padding copy was made);
        # zero those rows so they do not pollute the batch statistics.
        rows = (pl.program_id(0) * tile_m
                + jax.lax.broadcasted_iota(jnp.int32, h.shape, 0))
        h = jnp.where(rows < n_rows, h, 0.0)
    s = jnp.sum(h, axis=0, keepdims=True)          # (1, hidden)
    sq = jnp.sum(h * h, axis=0, keepdims=True)     # (1, hidden)
    # Each tile owns its own (8, hidden) output block -> no resident
    # accumulator, so the grid axis can be "parallel" (megacore on v7x).
    psum_ref[...] = jnp.broadcast_to(s, psum_ref.shape)
    psq_ref[...] = jnp.broadcast_to(sq, psq_ref.shape)


def _apply_kernel(x_ref, w1_ref, scale_ref, shift_ref, w2_ref, o_ref):
    """Pass 2: h = x @ W1; y = relu(h * scale + shift); out = y @ W2."""
    h = jnp.dot(x_ref[...], w1_ref[...], preferred_element_type=jnp.float32)
    h = jnp.maximum(h * scale_ref[...] + shift_ref[...], 0.0)  # folded BN+ReLU
    out = jnp.dot(h.astype(w2_ref.dtype), w2_ref[...],
                  preferred_element_type=jnp.float32)
    o_ref[...] = out.astype(o_ref.dtype)


def _tile_rows(n, tile_m):
    """Pick the row-tile size and grid length for batch size n."""
    n8 = ((n + 7) // 8) * 8                       # sublane alignment
    tm = max(8, min((tile_m // 8) * 8, n8))
    if n8 >= 16:
        # Keep >= 2 grid steps so both v7x TensorCores get work on the
        # "parallel" axes; harmless (~0.35us extra step) on single-TC chips.
        half = (((n8 + 1) // 2) + 7) // 8 * 8
        tm = min(tm, half)
    num_tiles = (n + tm - 1) // tm
    return tm, num_tiles


def mlp_projector(x, w1, gamma, beta, w2, *, tile_m=512):
    """x: (N, 512); w1: (512, 384); gamma/beta: (1, 384); w2: (384, 256).

    Returns (N, 256) in x.dtype."""
    n, d = x.shape
    hidden = w1.shape[1]
    out_dim = w2.shape[1]

    tm, num_tiles = _tile_rows(n, tile_m)
    mask_tail = (n % tm) != 0

    # bf16 operands for the MXU; statistics / BN math stays in f32.
    x_b = x.astype(jnp.bfloat16)
    w1_b = w1.astype(jnp.bfloat16)
    w2_b = w2.astype(jnp.bfloat16)

    # Constant block index => DMA'd once, VMEM-resident across all tiles.
    resident = lambda shape: pl.BlockSpec(shape, lambda i: (0, 0))

    # ---- Pass 1: batch statistics of h = x @ W1 (per-tile partials). ----
    psum, psq = pl.pallas_call(
        functools.partial(_stats_kernel, n_rows=n, tile_m=tm,
                          mask_tail=mask_tail),
        out_shape=(jax.ShapeDtypeStruct((num_tiles * 8, hidden), jnp.float32),
                   jax.ShapeDtypeStruct((num_tiles * 8, hidden), jnp.float32)),
        grid=(num_tiles,),
        in_specs=[pl.BlockSpec((tm, d), lambda i: (i, 0)),
                  resident((d, hidden))],
        out_specs=(pl.BlockSpec((8, hidden), lambda i: (i, 0)),
                   pl.BlockSpec((8, hidden), lambda i: (i, 0))),
        compiler_params=pltpu.CompilerParams(
            dimension_semantics=("parallel",)),
    )(x_b, w1_b)

    # Reduce the tiny per-tile partials (each tile broadcast its sums to the
    # 8 rows of its block; row 0 carries the value). Fold training-mode BN
    # (biased variance, true-N divisor) into one per-column scale/shift.
    col_sum = psum.reshape(num_tiles, 8, hidden)[:, 0, :].sum(
        axis=0, keepdims=True)
    col_sq = psq.reshape(num_tiles, 8, hidden)[:, 0, :].sum(
        axis=0, keepdims=True)
    inv_n = 1.0 / n
    mean = col_sum * inv_n
    # Single-pass E[h^2]-E[h]^2 in f32; fine for moderate N / unit-scale h.
    var = jnp.maximum(col_sq * inv_n - mean * mean, 0.0)
    inv_std = jax.lax.rsqrt(var + BN_EPS)
    scale = gamma.astype(jnp.float32) * inv_std
    shift = beta.astype(jnp.float32) - mean * scale

    # ---- Pass 2: normalize + ReLU + second matmul (parallel over rows). ----
    out = pl.pallas_call(
        _apply_kernel,
        out_shape=jax.ShapeDtypeStruct((n, out_dim), x.dtype),
        grid=(num_tiles,),
        in_specs=[pl.BlockSpec((tm, d), lambda i: (i, 0)),
                  resident((d, hidden)),
                  resident((1, hidden)),
                  resident((1, hidden)),
                  resident((hidden, out_dim))],
        out_specs=pl.BlockSpec((tm, out_dim), lambda i: (i, 0)),
        compiler_params=pltpu.CompilerParams(
            dimension_semantics=("parallel",)),
    )(x_b, w1_b, scale, shift, w2_b)

    return out


def init_params(key):
    """Deterministic params with shapes matching the PyTorch module."""
    k1, k2, k3, k4 = jax.random.split(key, 4)
    # PyTorch Linear weight is (out, in); pre-transpose to (in, out) for x @ W.
    bound1 = 1.0 / (INPUT_DIM ** 0.5)
    w1 = jax.random.uniform(k1, (HIDDEN_DIM, INPUT_DIM), jnp.float32,
                            -bound1, bound1).T
    bound2 = 1.0 / (HIDDEN_DIM ** 0.5)
    w2 = jax.random.uniform(k2, (OUTPUT_DIM, HIDDEN_DIM), jnp.float32,
                            -bound2, bound2).T
    # PyTorch init is gamma=1, beta=0; perturb so the folded BN scale/shift
    # path is genuinely exercised by the correctness check.
    gamma = 1.0 + 0.1 * jax.random.normal(k3, (1, HIDDEN_DIM), jnp.float32)
    beta = 0.1 * jax.random.normal(k4, (1, HIDDEN_DIM), jnp.float32)
    return w1, gamma, beta, w2


def reference(x, w1, gamma, beta, w2):
    """Pure-JAX reference mirroring the PyTorch forward (training-mode BN).

    Mirrors the kernel's bf16 operand casts so the comparison isolates the
    kernel logic rather than bf16 input rounding."""
    xb = x.astype(jnp.bfloat16)
    w1b = w1.astype(jnp.bfloat16)
    w2b = w2.astype(jnp.bfloat16)
    h = jnp.dot(xb, w1b, preferred_element_type=jnp.float32)
    mean = jnp.mean(h, axis=0, keepdims=True)
    var = jnp.mean((h - mean) ** 2, axis=0, keepdims=True)
    h = (h - mean) * jax.lax.rsqrt(var + BN_EPS) * gamma + beta
    h = jnp.maximum(h, 0.0)
    out = jnp.dot(h.astype(jnp.bfloat16), w2b,
                  preferred_element_type=jnp.float32)
    return out.astype(x.dtype)


if __name__ == "__main__":
    key = jax.random.PRNGKey(0)
    kx, kp = jax.random.split(key)

    N = 24  # small batch; deliberately not a multiple of the default tile
    x = jax.random.normal(kx, (N, INPUT_DIM), jnp.float32)
    w1, gamma, beta, w2 = init_params(kp)

    ref = reference(x, w1, gamma, beta, w2)

    # Tiny tile: exercises the multi-tile, unmasked (24 % 8 == 0) path.
    out_tiled = jax.block_until_ready(
        mlp_projector(x, w1, gamma, beta, w2, tile_m=8))
    # Default tile path: 2 tiles of 16 rows, masked tail in the stats pass.
    out_default = jax.block_until_ready(
        mlp_projector(x, w1, gamma, beta, w2))

    assert out_tiled.shape == (N, OUTPUT_DIM), out_tiled.shape
    assert out_default.shape == (N, OUTPUT_DIM), out_default.shape
    for out in (out_tiled, out_default):
        err = float(jnp.max(jnp.abs(out - ref)))
        assert jnp.allclose(out, ref, atol=5e-3, rtol=5e-3), err

    print("KERNEL_OK")
</pallas_src>

<mosaic_0001>
module attributes {stable_mosaic.version = 11 : i64} {
  func.func @_stats_kernel(%arg0: i32, %arg1: memref<8x512xbf16, #tpu.memory_space<vmem>>, %arg2: memref<512x384xbf16, #tpu.memory_space<vmem>>, %arg3: memref<8x384xf32, #tpu.memory_space<vmem>>, %arg4: memref<8x384xf32, #tpu.memory_space<vmem>>) attributes {dimension_semantics = [#tpu.dimension_semantics<parallel>], iteration_bounds = array<i64: 3>, scalar_prefetch = 0 : i64, scratch_operands = 0 : i64, tpu.core_type = #tpu.core_type<tc>, window_params = [{transform_indices = @transform_0, window_bounds = array<i64: 8, 512>}, {pipeline_mode = #tpu.pipeline_mode<synchronous>, transform_indices = @transform_1, window_bounds = array<i64: 512, 384>}, {transform_indices = @transform_2, window_bounds = array<i64: 8, 384>}, {transform_indices = @transform_3, window_bounds = array<i64: 8, 384>}]} {
    %c0 = arith.constant 0 : index
    %c0_0 = arith.constant 0 : index
    %0 = vector.load %arg1[%c0, %c0_0] : memref<8x512xbf16, #tpu.memory_space<vmem>>, vector<8x512xbf16>
    %c0_1 = arith.constant 0 : index
    %c0_2 = arith.constant 0 : index
    %1 = vector.load %arg2[%c0_1, %c0_2] : memref<512x384xbf16, #tpu.memory_space<vmem>>, vector<512x384xbf16>
    %cst = arith.constant dense<0.000000e+00> : vector<8x384xf32>
    %2 = tpu.matmul %0, %1, %cst {dimension_numbers = #tpu.dot_dimension_numbers<[1], [0], [0], [1], [0, 0, 1, 1], [], []>} : vector<8x512xbf16>, vector<512x384xbf16>, vector<8x384xf32> -> vector<8x384xf32>
    %cst_3 = arith.constant dense<0.000000e+00> : vector<384xf32>
    %3 = vector.multi_reduction <add>, %2, %cst_3 [0] : vector<8x384xf32> to vector<384xf32>
    %4 = vector.shape_cast %3 : vector<384xf32> to vector<1x384xf32>
    %5 = arith.mulf %2, %2 : vector<8x384xf32>
    %cst_4 = arith.constant dense<0.000000e+00> : vector<384xf32>
    %6 = vector.multi_reduction <add>, %5, %cst_4 [0] : vector<8x384xf32> to vector<384xf32>
    %7 = vector.shape_cast %6 : vector<384xf32> to vector<1x384xf32>
    %8 = vector.shape_cast %4 : vector<1x384xf32> to vector<1x384xf32>
    %9 = vector.broadcast %8 : vector<1x384xf32> to vector<8x384xf32>
    %c0_5 = arith.constant 0 : index
    %c0_6 = arith.constant 0 : index
    %10 = vector.load %arg3[%c0_5, %c0_6] : memref<8x384xf32, #tpu.memory_space<vmem>>, vector<8x384xf32>
    tpu.vector_store %arg3[%c0_5, %c0_6], %9 {strides = array<i32>} : memref<8x384xf32, #tpu.memory_space<vmem>>, vector<8x384xf32>,
    %11 = vector.shape_cast %7 : vector<1x384xf32> to vector<1x384xf32>
    %12 = vector.broadcast %11 : vector<1x384xf32> to vector<8x384xf32>
    %c0_7 = arith.constant 0 : index
    %c0_8 = arith.constant 0 : index
    %13 = vector.load %arg4[%c0_7, %c0_8] : memref<8x384xf32, #tpu.memory_space<vmem>>, vector<8x384xf32>
    tpu.vector_store %arg4[%c0_7, %c0_8], %12 {strides = array<i32>} : memref<8x384xf32, #tpu.memory_space<vmem>>, vector<8x384xf32>,
    return
  }
  func.func @transform_0(%arg0: i32) -> (i32, i32) {
    %c0_i32 = arith.constant 0 : i32
    %c0_i32_0 = arith.constant 0 : i32
    return %arg0, %c0_i32 : i32, i32
  }
  func.func @transform_1(%arg0: i32) -> (i32, i32) {
    %c0_i32 = arith.constant 0 : i32
    %c0_i32_0 = arith.constant 0 : i32
    %c0_i32_1 = arith.constant 0 : i32
    return %c0_i32, %c0_i32_0 : i32, i32
  }
  func.func @transform_2(%arg0: i32) -> (i32, i32) {
    %c0_i32 = arith.constant 0 : i32
    %c0_i32_0 = arith.constant 0 : i32
    return %arg0, %c0_i32 : i32, i32
  }
  func.func @transform_3(%arg0: i32) -> (i32, i32) {
    %c0_i32 = arith.constant 0 : i32
    %c0_i32_0 = arith.constant 0 : i32
    return %arg0, %c0_i32 : i32, i32
  }
}

</mosaic_0001>

<llo_original>
// kernel: tpu_custom_call.1
$region0: #{tpu_custom_call.1}
  #allocation0 [shape = 'u32[]', space=smem, size = 0x4, offset = 0x4, fixed_abs, tag = 'smem constant byte address 0x4 - core index']
  #allocation1 [shape = 'u32[144,128]{1,0:T(1,128)}', space=vmem, size = 0x12000, scoped, tag = 'internal scratch']
  %s0 = inlined_call_operand.hbm [shape: bf16[24,512], index: 0, kind: input, shape index: {}]
  %s1 = inlined_call_operand.hbm [shape: bf16[512,384], index: 1, kind: input, shape index: {}]
  %s2 = inlined_call_operand.hbm [shape: f32[24,384], index: 2, kind: output, shape index: {0}]
  %s3 = inlined_call_operand.hbm [shape: f32[24,384], index: 3, kind: output, shape index: {1}]
  %4 = xla_tuple %s2, %s3
  %s5 = sld [smem:[#allocation0]]
  $region57: #{tpu_custom_call.1} parent=0
    _
  %s7 = ssub.s32 1, %s5
  %s8 = scalar_select 0, %s7, %s5
  $region1: #{tpu_custom_call.1} parent=0
    #allocation2 [shape = 'u8[16384]{0}', space=vmem, size = 0x4000, scoped, tag = 'input window, operand 0']
    #allocation3 [shape = 's32[2]{0}', space=sflag, size = 0x8, scoped, tag = 'scoped memory for tpu_custom_call.1']
    #allocation4 [shape = 's32[2]{0}', space=sflag, size = 0x8, scoped, tag = 'scoped memory for tpu_custom_call.1']
    #allocation5 [shape = 'u8[393216]{0}', space=vmem, size = 0x60000, scoped, tag = 'input window, operand 1, single buffered']
    #allocation6 [shape = 's32[1]{0}', space=sflag, size = 0x4, scoped, tag = 'scoped memory for tpu_custom_call.1']
    #allocation7 [shape = 'u8[24576]{0}', space=vmem, size = 0x6000, scoped, tag = 'output window, operand 0']
    #allocation8 [shape = 'u8[24576]{0}', space=vmem, size = 0x6000, scoped, tag = 'output window, operand 1']
    #allocation9 [shape = 's32[2]{0}', space=sflag, size = 0x8, scoped, tag = 'scoped memory for tpu_custom_call.1']
    %9 = vsyncpa [#allocation3], 0
    %s10 = scalar_lea.sflag [#allocation3], 1
    %11 = vsyncpa %s10, 0
    %12 = vsyncpa [#allocation6], 0
    %13 = vsyncpa [#allocation4], 0
    %s14 = scalar_lea.sflag [#allocation4], 1
    %15 = vsyncpa %s14, 0
    %16 = vsyncpa [#allocation9], 0
    %s17 = scalar_lea.sflag [#allocation9], 1
    %18 = vsyncpa %s17, 0
    loop: start=0, step=1, limit=5
    $region2: #{tpu_custom_call.1} parent=1 // loop_pre_header
      _
    $region3: #{tpu_custom_call.1} parent=1 // loop_header
      %s20 = sphi 0, %s24
      %p21 = scmp.ge.s32.totalorder %s20, 5
      %s30 = sphi 0, %s32
      %s33 = sphi 0, %s30
      %s34 = sphi 0, %s33
      %s50 = sphi 0, %s34
      %s54 = sphi 0, %s54
      %s56 = sphi 0, %s54
      %s57 = sphi 0, %s56
      %s71 = sphi 0, %s57
      %s77 = sphi 0, %s79
      %s80 = sphi 0, %s77
      %s81 = sphi 0, %s80
      %s97 = sphi 0, %s81
      %s103 = sphi 0, %s105
      %s106 = sphi 0, %s103
      %s107 = sphi 0, %s106
      %s123 = sphi 0, %s107
    $region4: #{tpu_custom_call.1} parent=1 // loop_header_branch
      %23 = sbr.rel (%p21) target = $region8
    $region5: #{tpu_custom_call.1} parent=1 // loop_body
      %s25 = ssub.s32 %s20, 1
      %s26 = ssub.s32 %s20, 2
      %s27 = sadd.s32 %s20, 1
      %s28 = ssub.s32 %s20, %s27
      %p29 = scmp.eq.s32.totalorder %s28, 0
      %s31 = sadd.s32 %s30, 1
      %s32 = scalar_select %p29, %s30, %s31
      %p35 = pneg %p29
      %p36 = scmp.eq.s32.totalorder %s20, 2
      %p37 = por %p35, %p36
      %p38 = scmp.ne.s32.totalorder %s30, %s33
      %p39 = scmp.eq.s32.totalorder %s20, 0
      %p40 = por %p38, %p39
      %p41 = scmp.ne.s32.totalorder %s30, %s33
      %p42 = scmp.eq.s32.totalorder %s25, 2
      %p43 = por %p41, %p42
      %p44 = scmp.ne.s32.totalorder %s33, %s34
      %p45 = scmp.eq.s32.totalorder %s25, 0
      %p46 = por %p44, %p45
      %p47 = scmp.ne.s32.totalorder %s33, %s34
      %p48 = scmp.eq.s32.totalorder %s26, 2
      %p49 = por %p47, %p48
      %p51 = scmp.ne.s32.totalorder %s34, %s50
      %p52 = scmp.eq.s32.totalorder %s26, 0
      %p53 = por %p51, %p52
      %s55 = sadd.s32 %s54, 1
      %p58 = scmp.eq.s32.totalorder %s20, 2
      %p59 = scmp.ne.s32.totalorder %s54, %s56
      %p60 = scmp.eq.s32.totalorder %s20, 0
      %p61 = por %p59, %p60
      %p62 = scmp.ne.s32.totalorder %s54, %s56
      %p63 = scmp.eq.s32.totalorder %s25, 2
      %p64 = por %p62, %p63
      %p65 = scmp.ne.s32.totalorder %s56, %s57
      %p66 = scmp.eq.s32.totalorder %s25, 0
      %p67 = por %p65, %p66
      %p68 = scmp.ne.s32.totalorder %s56, %s57
      %p69 = scmp.eq.s32.totalorder %s26, 2
      %p70 = por %p68, %p69
      %p72 = scmp.ne.s32.totalorder %s57, %s71
      %p73 = scmp.eq.s32.totalorder %s26, 0
      %p74 = por %p72, %p73
      %s75 = ssub.s32 %s20, %s27
      %p76 = scmp.eq.s32.totalorder %s75, 0
      %s78 = sadd.s32 %s77, 1
      %s79 = scalar_select %p76, %s77, %s78
      %p82 = pneg %p76
      %p83 = scmp.eq.s32.totalorder %s20, 2
      %p84 = por %p82, %p83
      %p85 = scmp.ne.s32.totalorder %s77, %s80
      %p86 = scmp.eq.s32.totalorder %s20, 0
      %p87 = por %p85, %p86
      %p88 = scmp.ne.s32.totalorder %s77, %s80
      %p89 = scmp.eq.s32.totalorder %s25, 2
      %p90 = por %p88, %p89
      %p91 = scmp.ne.s32.totalorder %s80, %s81
      %p92 = scmp.eq.s32.totalorder %s25, 0
      %p93 = por %p91, %p92
      %p94 = scmp.ne.s32.totalorder %s80, %s81
      %p95 = scmp.eq.s32.totalorder %s26, 2
      %p96 = por %p94, %p95
      %p98 = scmp.ne.s32.totalorder %s81, %s97
      %p99 = scmp.eq.s32.totalorder %s26, 0
      %p100 = por %p98, %p99
      %s101 = ssub.s32 %s20, %s27
      %p102 = scmp.eq.s32.totalorder %s101, 0
      %s104 = sadd.s32 %s103, 1
      %s105 = scalar_select %p102, %s103, %s104
      %p108 = pneg %p102
      %p109 = scmp.eq.s32.totalorder %s20, 2
      %p110 = por %p108, %p109
      %p111 = scmp.ne.s32.totalorder %s103, %s106
      %p112 = scmp.eq.s32.totalorder %s20, 0
      %p113 = por %p111, %p112
      %p114 = scmp.ne.s32.totalorder %s103, %s106
      %p115 = scmp.eq.s32.totalorder %s25, 2
      %p116 = por %p114, %p115
      %p117 = scmp.ne.s32.totalorder %s106, %s107
      %p118 = scmp.eq.s32.totalorder %s25, 0
      %p119 = por %p117, %p118
      %p120 = scmp.ne.s32.totalorder %s106, %s107
      %p121 = scmp.eq.s32.totalorder %s26, 2
      %p122 = por %p120, %p121
      %p124 = scmp.ne.s32.totalorder %s107, %s123
      %p125 = scmp.eq.s32.totalorder %s26, 0
      %p126 = por %p124, %p125
      %p127 = scmp.le.s32.totalorder 1, %s20
      %p128 = scmp.lt.s32.totalorder %s20, 4
      %p129 = pnand %p127, %p128
      %p130 = pneg %p129
      // Predicated region
      $region9: #{tpu_custom_call.1} parent=5 // pred_check
        _
      $region10: #{tpu_custom_call.1} parent=5 // pred_check_branch
        %132 = sbr.rel (%p129) target = $region12
      $region11: #{tpu_custom_call.1} parent=5 // pred_region
        %s133 = ssub.s32 %s20, 1
        // Predicated region
        $region13: #{tpu_custom_call.1} parent=11 // pred_check
          %p134 = pneg %p67
        $region14: #{tpu_custom_call.1} parent=11 // pred_check_branch
          %136 = sbr.rel (%p134) target = $region16
        $region15: #{tpu_custom_call.1} parent=11 // pred_region
          %s138 = ssub.s32 12288, 12288
          %139 = vsyncadd [#allocation6], %s138
          %s140 = sshll.u32 [#allocation5], 4
          %s141 = int_to_ptr.vmem [resolvable:$true] %s140
          %146 = dma.hbm_to_vmem [thread:$0]  %s1, 12288, %s141, [#allocation6], 192, 192, 12
        $region16: #{tpu_custom_call.1} parent=11 // pred_fallthru
          _
      $region12: #{tpu_custom_call.1} parent=5 // pred_fallthru
        _
      %p147 = scmp.lt.s32.totalorder %s20, 3
      // Predicated region
      $region17: #{tpu_custom_call.1} parent=5 // pred_check
        %p148 = pneg %p147
      $region18: #{tpu_custom_call.1} parent=5 // pred_check_branch
        %150 = sbr.rel (%p148) target = $region20
      $region19: #{tpu_custom_call.1} parent=5 // pred_region
        // Predicated region
        $region21: #{tpu_custom_call.1} parent=19 // pred_check
          %p151 = pneg %p40
        $region22: #{tpu_custom_call.1} parent=19 // pred_check_branch
          %153 = sbr.rel (%p151) target = $region24
        $region23: #{tpu_custom_call.1} parent=19 // pred_region
          %s154 = sand.u32 %s30, 1
          %s155 = scalar_lea.sflag [#allocation3], %s154
          %s156 = sand.u32 %s30, 1
          %s157 = smul.addr %s156, 16
          %s158 = scalar_lea.vmem [#allocation2], %s157
          %s160 = ssub.s32 256, 256
          %161 = vsyncadd %s155, %s160
          %s162 = smul.addr %s20, 4
          %s163 = smul.addr %s162, 64
          %s164 = scalar_lea.hbm %s0, %s163
          %s166 = sshll.u32 %s158, 4
          %s167 = int_to_ptr.vmem [resolvable:$true] %s166
          %169 = dma.hbm_to_vmem [thread:$0]  %s164, 256, %s167, %s155
        $region24: #{tpu_custom_call.1} parent=19 // pred_fallthru
          _
      $region20: #{tpu_custom_call.1} parent=5 // pred_fallthru
        _
      %p170 = scmp.le.s32.totalorder 1, %s20
      %p171 = scmp.lt.s32.totalorder %s20, 4
      %p172 = pnand %p170, %p171
      %p173 = pneg %p172
      // Predicated region
      $region25: #{tpu_custom_call.1} parent=5 // pred_check
        _
      $region26: #{tpu_custom_call.1} parent=5 // pred_check_branch
        %175 = sbr.rel (%p172) target = $region28
      $region27: #{tpu_custom_call.1} parent=5 // pred_region
        %s176 = ssub.s32 %s20, 1
        %s177 = sand.u32 %s33, 1
        %s178 = scalar_lea.sflag [#allocation3], %s177
        %s179 = sand.u32 %s33, 1
        %s180 = smul.addr %s179, 16
        %s181 = scalar_lea.vmem [#allocation2], %s180
        // Predicated region
        $region29: #{tpu_custom_call.1} parent=27 // pred_check
          %p182 = pneg %p46
        $region30: #{tpu_custom_call.1} parent=27 // pred_check_branch
          %184 = sbr.rel (%p182) target = $region32
        $region31: #{tpu_custom_call.1} parent=27 // pred_region
          %185 = dma.done %s178, 256
        $region32: #{tpu_custom_call.1} parent=27 // pred_fallthru
          _
        // Predicated region
        $region33: #{tpu_custom_call.1} parent=27 // pred_check
          %p186 = pneg %p67
        $region34: #{tpu_custom_call.1} parent=27 // pred_check_branch
          %188 = sbr.rel (%p186) target = $region36
        $region35: #{tpu_custom_call.1} parent=27 // pred_region
          %189 = dma.done [#allocation6], 12288
        $region36: #{tpu_custom_call.1} parent=27 // pred_fallthru
          _
        %s190 = sand.u32 %s33, 1
        %s191 = scalar_lea.sflag [#allocation3], %s190
        %s192 = sand.u32 %s33, 1
        %s193 = smul.addr %s192, 16
        %s194 = scalar_lea.vmem [#allocation2], %s193
        %p195 = pneg %p46
        %p196 = pneg %p43
        %p197 = pneg %p67
        %p198 = pneg %p64
        %p199 = pneg %p93
        %p200 = pneg %p90
        %s201 = sand.u32 %s80, 1
        %s202 = scalar_lea.sflag [#allocation4], %s201
        %s203 = sand.u32 %s80, 1
        %s204 = smul.addr %s203, 24
        %s205 = scalar_lea.vmem [#allocation7], %s204
        %p206 = pneg %p119
        %p207 = pneg %p116
        %s208 = sand.u32 %s106, 1
        %s209 = scalar_lea.sflag [#allocation9], %s208
        %s210 = sand.u32 %s106, 1
        %s211 = smul.addr %s210, 24
        %s212 = scalar_lea.vmem [#allocation8], %s211
        %v214 = vld [vmem:[%s181] sm:$0xff]
        %v215 = vld [vmem:[%s181 + $0x8] sm:$0xff]
        %v216 = vld [vmem:[#allocation5] sm:$0xff]
        %v217 = vld [vmem:[#allocation5 + $0x8] sm:$0xf]
        %v218 = vld [vmem:[#allocation5 + $0xc] sm:$0xff]
        %v219 = vld [vmem:[#allocation5 + $0x14] sm:$0xf]
        %v220 = vld [vmem:[#allocation5 + $0x18] sm:$0xff]
        %v221 = vld [vmem:[#allocation5 + $0x20] sm:$0xf]
        %v222 = vld [vmem:[#allocation5 + $0x24] sm:$0xff]
        %v223 = vld [vmem:[#allocation5 + $0x2c] sm:$0xf]
        %v224 = vld [vmem:[#allocation5 + $0x30] sm:$0xff]
        %v225 = vld [vmem:[#allocation5 + $0x38] sm:$0xf]
        %v226 = vld [vmem:[#allocation5 + $0x3c] sm:$0xff]
        %v227 = vld [vmem:[#allocation5 + $0x44] sm:$0xf]
        %v228 = vld [vmem:[#allocation5 + $0x48] sm:$0xff]
        %v229 = vld [vmem:[#allocation5 + $0x50] sm:$0xf]
        %v230 = vld [vmem:[#allocation5 + $0x54] sm:$0xff]
        %v231 = vld [vmem:[#allocation5 + $0x5c] sm:$0xf]
        %v232 = vld [vmem:[#allocation5 + $0x60] sm:$0xff]
        %v233 = vld [vmem:[#allocation5 + $0x68] sm:$0xf]
        %v234 = vld [vmem:[#allocation5 + $0x6c] sm:$0xff]
        %v235 = vld [vmem:[#allocation5 + $0x74] sm:$0xf]
        %v236 = vld [vmem:[#allocation5 + $0x78] sm:$0xff]
        %v237 = vld [vmem:[#allocation5 + $0x80] sm:$0xf]
        %v238 = vld [vmem:[#allocation5 + $0x84] sm:$0xff]
        %v239 = vld [vmem:[#allocation5 + $0x8c] sm:$0xf]
        %v240 = vld [vmem:[#allocation5 + $0x90] sm:$0xff]
        %v241 = vld [vmem:[#allocation5 + $0x98] sm:$0xf]
        %v242 = vld [vmem:[#allocation5 + $0x9c] sm:$0xff]
        %v243 = vld [vmem:[#allocation5 + $0xa4] sm:$0xf]
        %v244 = vld [vmem:[#allocation5 + $0xa8] sm:$0xff]
        %v245 = vld [vmem:[#allocation5 + $0xb0] sm:$0xf]
        %v246 = vld [vmem:[#allocation5 + $0xb4] sm:$0xff]
        %v247 = vld [vmem:[#allocation5 + $0xbc] sm:$0xf]
        %v248 = vld [vmem:[#allocation5 + $0xc0] sm:$0xff]
        %v249 = vld [vmem:[#allocation5 + $0xc8] sm:$0xf]
        %v250 = vld [vmem:[#allocation5 + $0xcc] sm:$0xff]
        %v251 = vld [vmem:[#allocation5 + $0xd4] sm:$0xf]
        %v252 = vld [vmem:[#allocation5 + $0xd8] sm:$0xff]
        %v253 = vld [vmem:[#allocation5 + $0xe0] sm:$0xf]
        %v254 = vld [vmem:[#allocation5 + $0xe4] sm:$0xff]
        %v255 = vld [vmem:[#allocation5 + $0xec] sm:$0xf]
        %v256 = vld [vmem:[#allocation5 + $0xf0] sm:$0xff]
        %v257 = vld [vmem:[#allocation5 + $0xf8] sm:$0xf]
        %v258 = vld [vmem:[#allocation5 + $0xfc] sm:$0xff]
        %v259 = vld [vmem:[#allocation5 + $0x104] sm:$0xf]
        %v260 = vld [vmem:[#allocation5 + $0x108] sm:$0xff]
        %v261 = vld [vmem:[#allocation5 + $0x110] sm:$0xf]
        %v262 = vld [vmem:[#allocation5 + $0x114] sm:$0xff]
        %v263 = vld [vmem:[#allocation5 + $0x11c] sm:$0xf]
        %v264 = vld [vmem:[#allocation5 + $0x120] sm:$0xff]
        %v265 = vld [vmem:[#allocation5 + $0x128] sm:$0xf]
        %v266 = vld [vmem:[#allocation5 + $0x12c] sm:$0xff]
        %v267 = vld [vmem:[#allocation5 + $0x134] sm:$0xf]
        %v268 = vld [vmem:[#allocation5 + $0x138] sm:$0xff]
        %v269 = vld [vmem:[#allocation5 + $0x140] sm:$0xf]
        %v270 = vld [vmem:[#allocation5 + $0x144] sm:$0xff]
        %v271 = vld [vmem:[#allocation5 + $0x14c] sm:$0xf]
        %v272 = vld [vmem:[#allocation5 + $0x150] sm:$0xff]
        %v273 = vld [vmem:[#allocation5 + $0x158] sm:$0xf]
        %v274 = vld [vmem:[#allocation5 + $0x15c] sm:$0xff]
        %v275 = vld [vmem:[#allocation5 + $0x164] sm:$0xf]
        %v276 = vld [vmem:[#allocation5 + $0x168] sm:$0xff]
        %v277 = vld [vmem:[#allocation5 + $0x170] sm:$0xf]
        %v278 = vld [vmem:[#allocation5 + $0x174] sm:$0xff]
        %v279 = vld [vmem:[#allocation5 + $0x17c] sm:$0xf]
        %v280 = vld [vmem:[#allocation5 + $0x180] sm:$0xff]
        %v281 = vld [vmem:[#allocation5 + $0x188] sm:$0xf]
        %v282 = vld [vmem:[#allocation5 + $0x18c] sm:$0xff]
        %v283 = vld [vmem:[#allocation5 + $0x194] sm:$0xf]
        %v284 = vld [vmem:[#allocation5 + $0x198] sm:$0xff]
        %v285 = vld [vmem:[#allocation5 + $0x1a0] sm:$0xf]
        %v286 = vld [vmem:[#allocation5 + $0x1a4] sm:$0xff]
        %v287 = vld [vmem:[#allocation5 + $0x1ac] sm:$0xf]
        %v288 = vld [vmem:[#allocation5 + $0x1b0] sm:$0xff]
        %v289 = vld [vmem:[#allocation5 + $0x1b8] sm:$0xf]
        %v290 = vld [vmem:[#allocation5 + $0x1bc] sm:$0xff]
        %v291 = vld [vmem:[#allocation5 + $0x1c4] sm:$0xf]
        %v292 = vld [vmem:[#allocation5 + $0x1c8] sm:$0xff]
        %v293 = vld [vmem:[#allocation5 + $0x1d0] sm:$0xf]
        %v294 = vld [vmem:[#allocation5 + $0x1d4] sm:$0xff]
        %v295 = vld [vmem:[#allocation5 + $0x1dc] sm:$0xf]
        %v296 = vld [vmem:[#allocation5 + $0x1e0] sm:$0xff]
        %v297 = vld [vmem:[#allocation5 + $0x1e8] sm:$0xf]
        %v298 = vld [vmem:[#allocation5 + $0x1ec] sm:$0xff]
        %v299 = vld [vmem:[#allocation5 + $0x1f4] sm:$0xf]
        %v300 = vld [vmem:[#allocation5 + $0x1f8] sm:$0xff]
        %v301 = vld [vmem:[#allocation5 + $0x200] sm:$0xf]
        %v302 = vld [vmem:[#allocation5 + $0x204] sm:$0xff]
        %v303 = vld [vmem:[#allocation5 + $0x20c] sm:$0xf]
        %v304 = vld [vmem:[#allocation5 + $0x210] sm:$0xff]
        %v305 = vld [vmem:[#allocation5 + $0x218] sm:$0xf]
        %v306 = vld [vmem:[#allocation5 + $0x21c] sm:$0xff]
        %v307 = vld [vmem:[#allocation5 + $0x224] sm:$0xf]
        %v308 = vld [vmem:[#allocation5 + $0x228] sm:$0xff]
        %v309 = vld [vmem:[#allocation5 + $0x230] sm:$0xf]
        %v310 = vld [vmem:[#allocation5 + $0x234] sm:$0xff]
        %v311 = vld [vmem:[#allocation5 + $0x23c] sm:$0xf]
        %v312 = vld [vmem:[#allocation5 + $0x240] sm:$0xff]
        %v313 = vld [vmem:[#allocation5 + $0x248] sm:$0xf]
        %v314 = vld [vmem:[#allocation5 + $0x24c] sm:$0xff]
        %v315 = vld [vmem:[#allocation5 + $0x254] sm:$0xf]
        %v316 = vld [vmem:[#allocation5 + $0x258] sm:$0xff]
        %v317 = vld [vmem:[#allocation5 + $0x260] sm:$0xf]
        %v318 = vld [vmem:[#allocation5 + $0x264] sm:$0xff]
        %v319 = vld [vmem:[#allocation5 + $0x26c] sm:$0xf]
        %v320 = vld [vmem:[#allocation5 + $0x270] sm:$0xff]
        %v321 = vld [vmem:[#allocation5 + $0x278] sm:$0xf]
        %v322 = vld [vmem:[#allocation5 + $0x27c] sm:$0xff]
        %v323 = vld [vmem:[#allocation5 + $0x284] sm:$0xf]
        %v324 = vld [vmem:[#allocation5 + $0x288] sm:$0xff]
        %v325 = vld [vmem:[#allocation5 + $0x290] sm:$0xf]
        %v326 = vld [vmem:[#allocation5 + $0x294] sm:$0xff]
        %v327 = vld [vmem:[#allocation5 + $0x29c] sm:$0xf]
        %v328 = vld [vmem:[#allocation5 + $0x2a0] sm:$0xff]
        %v329 = vld [vmem:[#allocation5 + $0x2a8] sm:$0xf]
        %v330 = vld [vmem:[#allocation5 + $0x2ac] sm:$0xff]
        %v331 = vld [vmem:[#allocation5 + $0x2b4] sm:$0xf]
        %v332 = vld [vmem:[#allocation5 + $0x2b8] sm:$0xff]
        %v333 = vld [vmem:[#allocation5 + $0x2c0] sm:$0xf]
        %v334 = vld [vmem:[#allocation5 + $0x2c4] sm:$0xff]
        %v335 = vld [vmem:[#allocation5 + $0x2cc] sm:$0xf]
        %v336 = vld [vmem:[#allocation5 + $0x2d0] sm:$0xff]
        %v337 = vld [vmem:[#allocation5 + $0x2d8] sm:$0xf]
        %v338 = vld [vmem:[#allocation5 + $0x2dc] sm:$0xff]
        %v339 = vld [vmem:[#allocation5 + $0x2e4] sm:$0xf]
        %v340 = vld [vmem:[#allocation5 + $0x2e8] sm:$0xff]
        %v341 = vld [vmem:[#allocation5 + $0x2f0] sm:$0xf]
        %v342 = vld [vmem:[#allocation5 + $0x2f4] sm:$0xff]
        %v343 = vld [vmem:[#allocation5 + $0x2fc] sm:$0xf]
        %v346 = vunpack.c.l.b16 %v214
        %v347 = vunpack.c.h.b16 %v214
        %v348 = vunpack.c.l.b16 %v215
        %v349 = vunpack.c.h.b16 %v215
        %v350 = vpack.c.b16 %v346, %v346
        %v351 = vpack.c.b16 %v347, %v347
        %v352 = vpack.c.b16 %v348, %v348
        %v353 = vpack.c.b16 %v349, %v349
        %v486 = vunpack.c.l.b16 %v216
        %v487 = vunpack.c.h.b16 %v216
        %v488 = vunpack.c.l.b16 %v217
        %v489 = vunpack.c.l.b16 %v218
        %v490 = vunpack.c.h.b16 %v218
        %v491 = vunpack.c.l.b16 %v219
        %v492 = vunpack.c.l.b16 %v220
        %v493 = vunpack.c.h.b16 %v220
        %v494 = vunpack.c.l.b16 %v221
        %v495 = vunpack.c.l.b16 %v222
        %v496 = vunpack.c.h.b16 %v222
        %v497 = vunpack.c.l.b16 %v223
        %v498 = vunpack.c.l.b16 %v224
        %v499 = vunpack.c.h.b16 %v224
        %v500 = vunpack.c.l.b16 %v225
        %v501 = vunpack.c.l.b16 %v226
        %v502 = vunpack.c.h.b16 %v226
        %v503 = vunpack.c.l.b16 %v227
        %v504 = vunpack.c.l.b16 %v228
        %v505 = vunpack.c.h.b16 %v228
        %v506 = vunpack.c.l.b16 %v229
        %v507 = vunpack.c.l.b16 %v230
        %v508 = vunpack.c.h.b16 %v230
        %v509 = vunpack.c.l.b16 %v231
        %v510 = vunpack.c.l.b16 %v232
        %v511 = vunpack.c.h.b16 %v232
        %v512 = vunpack.c.l.b16 %v233
        %v513 = vunpack.c.l.b16 %v234
        %v514 = vunpack.c.h.b16 %v234
        %v515 = vunpack.c.l.b16 %v235
        %v516 = vunpack.c.l.b16 %v236
        %v517 = vunpack.c.h.b16 %v236
        %v518 = vunpack.c.l.b16 %v237
        %v519 = vunpack.c.l.b16 %v238
        %v520 = vunpack.c.h.b16 %v238
        %v521 = vunpack.c.l.b16 %v239
        %v522 = vunpack.c.l.b16 %v240
        %v523 = vunpack.c.h.b16 %v240
        %v524 = vunpack.c.l.b16 %v241
        %v525 = vunpack.c.l.b16 %v242
        %v526 = vunpack.c.h.b16 %v242
        %v527 = vunpack.c.l.b16 %v243
        %v528 = vunpack.c.l.b16 %v244
        %v529 = vunpack.c.h.b16 %v244
        %v530 = vunpack.c.l.b16 %v245
        %v531 = vunpack.c.l.b16 %v246
        %v532 = vunpack.c.h.b16 %v246
        %v533 = vunpack.c.l.b16 %v247
        %v534 = vunpack.c.l.b16 %v248
        %v535 = vunpack.c.h.b16 %v248
        %v536 = vunpack.c.l.b16 %v249
        %v537 = vunpack.c.l.b16 %v250
        %v538 = vunpack.c.h.b16 %v250
        %v539 = vunpack.c.l.b16 %v251
        %v540 = vunpack.c.l.b16 %v252
        %v541 = vunpack.c.h.b16 %v252
        %v542 = vunpack.c.l.b16 %v253
        %v543 = vunpack.c.l.b16 %v254
        %v544 = vunpack.c.h.b16 %v254
        %v545 = vunpack.c.l.b16 %v255
        %v546 = vunpack.c.l.b16 %v256
        %v547 = vunpack.c.h.b16 %v256
        %v548 = vunpack.c.l.b16 %v257
        %v549 = vunpack.c.l.b16 %v258
        %v550 = vunpack.c.h.b16 %v258
        %v551 = vunpack.c.l.b16 %v259
        %v552 = vunpack.c.l.b16 %v260
        %v553 = vunpack.c.h.b16 %v260
        %v554 = vunpack.c.l.b16 %v261
        %v555 = vunpack.c.l.b16 %v262
        %v556 = vunpack.c.h.b16 %v262
        %v557 = vunpack.c.l.b16 %v263
        %v558 = vunpack.c.l.b16 %v264
        %v559 = vunpack.c.h.b16 %v264
        %v560 = vunpack.c.l.b16 %v265
        %v561 = vunpack.c.l.b16 %v266
        %v562 = vunpack.c.h.b16 %v266
        %v563 = vunpack.c.l.b16 %v267
        %v564 = vunpack.c.l.b16 %v268
        %v565 = vunpack.c.h.b16 %v268
        %v566 = vunpack.c.l.b16 %v269
        %v567 = vunpack.c.l.b16 %v270
        %v568 = vunpack.c.h.b16 %v270
        %v569 = vunpack.c.l.b16 %v271
        %v570 = vunpack.c.l.b16 %v272
        %v571 = vunpack.c.h.b16 %v272
        %v572 = vunpack.c.l.b16 %v273
        %v573 = vunpack.c.l.b16 %v274
        %v574 = vunpack.c.h.b16 %v274
        %v575 = vunpack.c.l.b16 %v275
        %v576 = vunpack.c.l.b16 %v276
        %v577 = vunpack.c.h.b16 %v276
        %v578 = vunpack.c.l.b16 %v277
        %v579 = vunpack.c.l.b16 %v278
        %v580 = vunpack.c.h.b16 %v278
        %v581 = vunpack.c.l.b16 %v279
        %v582 = vunpack.c.l.b16 %v280
        %v583 = vunpack.c.h.b16 %v280
        %v584 = vunpack.c.l.b16 %v281
        %v585 = vunpack.c.l.b16 %v282
        %v586 = vunpack.c.h.b16 %v282
        %v587 = vunpack.c.l.b16 %v283
        %v588 = vunpack.c.l.b16 %v284
        %v589 = vunpack.c.h.b16 %v284
        %v590 = vunpack.c.l.b16 %v285
        %v591 = vunpack.c.l.b16 %v286
        %v592 = vunpack.c.h.b16 %v286
        %v593 = vunpack.c.l.b16 %v287
        %v594 = vunpack.c.l.b16 %v288
        %v595 = vunpack.c.h.b16 %v288
        %v596 = vunpack.c.l.b16 %v289
        %v597 = vunpack.c.l.b16 %v290
        %v598 = vunpack.c.h.b16 %v290
        %v599 = vunpack.c.l.b16 %v291
        %v600 = vunpack.c.l.b16 %v292
        %v601 = vunpack.c.h.b16 %v292
        %v602 = vunpack.c.l.b16 %v293
        %v603 = vunpack.c.l.b16 %v294
        %v604 = vunpack.c.h.b16 %v294
        %v605 = vunpack.c.l.b16 %v295
        %v606 = vunpack.c.l.b16 %v296
        %v607 = vunpack.c.h.b16 %v296
        %v608 = vunpack.c.l.b16 %v297
        %v609 = vunpack.c.l.b16 %v298
        %v610 = vunpack.c.h.b16 %v298
        %v611 = vunpack.c.l.b16 %v299
        %v612 = vunpack.c.l.b16 %v300
        %v613 = vunpack.c.h.b16 %v300
        %v614 = vunpack.c.l.b16 %v301
        %v615 = vunpack.c.l.b16 %v302
        %v616 = vunpack.c.h.b16 %v302
        %v617 = vunpack.c.l.b16 %v303
        %v618 = vunpack.c.l.b16 %v304
        %v619 = vunpack.c.h.b16 %v304
        %v620 = vunpack.c.l.b16 %v305
        %v621 = vunpack.c.l.b16 %v306
        %v622 = vunpack.c.h.b16 %v306
        %v623 = vunpack.c.l.b16 %v307
        %v624 = vunpack.c.l.b16 %v308
        %v625 = vunpack.c.h.b16 %v308
        %v626 = vunpack.c.l.b16 %v309
        %v627 = vunpack.c.l.b16 %v310
        %v628 = vunpack.c.h.b16 %v310
        %v629 = vunpack.c.l.b16 %v311
        %v630 = vunpack.c.l.b16 %v312
        %v631 = vunpack.c.h.b16 %v312
        %v632 = vunpack.c.l.b16 %v313
        %v633 = vunpack.c.l.b16 %v314
        %v634 = vunpack.c.h.b16 %v314
        %v635 = vunpack.c.l.b16 %v315
        %v636 = vunpack.c.l.b16 %v316
        %v637 = vunpack.c.h.b16 %v316
        %v638 = vunpack.c.l.b16 %v317
        %v639 = vunpack.c.l.b16 %v318
        %v640 = vunpack.c.h.b16 %v318
        %v641 = vunpack.c.l.b16 %v319
        %v642 = vunpack.c.l.b16 %v320
        %v643 = vunpack.c.h.b16 %v320
        %v644 = vunpack.c.l.b16 %v321
        %v645 = vunpack.c.l.b16 %v322
        %v646 = vunpack.c.h.b16 %v322
        %v647 = vunpack.c.l.b16 %v323
        %v648 = vunpack.c.l.b16 %v324
        %v649 = vunpack.c.h.b16 %v324
        %v650 = vunpack.c.l.b16 %v325
        %v651 = vunpack.c.l.b16 %v326
        %v652 = vunpack.c.h.b16 %v326
        %v653 = vunpack.c.l.b16 %v327
        %v654 = vunpack.c.l.b16 %v328
        %v655 = vunpack.c.h.b16 %v328
        %v656 = vunpack.c.l.b16 %v329
        %v657 = vunpack.c.l.b16 %v330
        %v658 = vunpack.c.h.b16 %v330
        %v659 = vunpack.c.l.b16 %v331
        %v660 = vunpack.c.l.b16 %v332
        %v661 = vunpack.c.h.b16 %v332
        %v662 = vunpack.c.l.b16 %v333
        %v663 = vunpack.c.l.b16 %v334
        %v664 = vunpack.c.h.b16 %v334
        %v665 = vunpack.c.l.b16 %v335
        %v666 = vunpack.c.l.b16 %v336
        %v667 = vunpack.c.h.b16 %v336
        %v668 = vunpack.c.l.b16 %v337
        %v669 = vunpack.c.l.b16 %v338
        %v670 = vunpack.c.h.b16 %v338
        %v671 = vunpack.c.l.b16 %v339
        %v672 = vunpack.c.l.b16 %v340
        %v673 = vunpack.c.h.b16 %v340
        %v674 = vunpack.c.l.b16 %v341
        %v675 = vunpack.c.l.b16 %v342
        %v676 = vunpack.c.h.b16 %v342
        %v677 = vunpack.c.l.b16 %v343
        %v678 = vpack.c.b16 %v489, %v486
        %v679 = vpack.c.b16 %v490, %v487
        %v680 = vpack.c.b16 %v491, %v488
        %v681 = vpack.c.b16 %v495, %v492
        %v682 = vpack.c.b16 %v496, %v493
        %v683 = vpack.c.b16 %v497, %v494
        %v684 = vpack.c.b16 %v501, %v498
        %v685 = vpack.c.b16 %v502, %v499
        %v686 = vpack.c.b16 %v503, %v500
        %v687 = vpack.c.b16 %v507, %v504
        %v688 = vpack.c.b16 %v508, %v505
        %v689 = vpack.c.b16 %v509, %v506
        %v690 = vpack.c.b16 %v513, %v510
        %v691 = vpack.c.b16 %v514, %v511
        %v692 = vpack.c.b16 %v515, %v512
        %v693 = vpack.c.b16 %v519, %v516
        %v694 = vpack.c.b16 %v520, %v517
        %v695 = vpack.c.b16 %v521, %v518
        %v696 = vpack.c.b16 %v525, %v522
        %v697 = vpack.c.b16 %v526, %v523
        %v698 = vpack.c.b16 %v527, %v524
        %v699 = vpack.c.b16 %v531, %v528
        %v700 = vpack.c.b16 %v532, %v529
        %v701 = vpack.c.b16 %v533, %v530
        %v702 = vpack.c.b16 %v537, %v534
        %v703 = vpack.c.b16 %v538, %v535
        %v704 = vpack.c.b16 %v539, %v536
        %v705 = vpack.c.b16 %v543, %v540
        %v706 = vpack.c.b16 %v544, %v541
        %v707 = vpack.c.b16 %v545, %v542
        %v708 = vpack.c.b16 %v549, %v546
        %v709 = vpack.c.b16 %v550, %v547
        %v710 = vpack.c.b16 %v551, %v548
        %v711 = vpack.c.b16 %v555, %v552
        %v712 = vpack.c.b16 %v556, %v553
        %v713 = vpack.c.b16 %v557, %v554
        %v714 = vpack.c.b16 %v561, %v558
        %v715 = vpack.c.b16 %v562, %v559
        %v716 = vpack.c.b16 %v563, %v560
        %v717 = vpack.c.b16 %v567, %v564
        %v718 = vpack.c.b16 %v568, %v565
        %v719 = vpack.c.b16 %v569, %v566
        %v720 = vpack.c.b16 %v573, %v570
        %v721 = vpack.c.b16 %v574, %v571
        %v722 = vpack.c.b16 %v575, %v572
        %v723 = vpack.c.b16 %v579, %v576
        %v724 = vpack.c.b16 %v580, %v577
        %v725 = vpack.c.b16 %v581, %v578
        %v726 = vpack.c.b16 %v585, %v582
        %v727 = vpack.c.b16 %v586, %v583
        %v728 = vpack.c.b16 %v587, %v584
        %v729 = vpack.c.b16 %v591, %v588
        %v730 = vpack.c.b16 %v592, %v589
        %v731 = vpack.c.b16 %v593, %v590
        %v732 = vpack.c.b16 %v597, %v594
        %v733 = vpack.c.b16 %v598, %v595
        %v734 = vpack.c.b16 %v599, %v596
        %v735 = vpack.c.b16 %v603, %v600
        %v736 = vpack.c.b16 %v604, %v601
        %v737 = vpack.c.b16 %v605, %v602
        %v738 = vpack.c.b16 %v609, %v606
        %v739 = vpack.c.b16 %v610, %v607
        %v740 = vpack.c.b16 %v611, %v608
        %v741 = vpack.c.b16 %v615, %v612
        %v742 = vpack.c.b16 %v616, %v613
        %v743 = vpack.c.b16 %v617, %v614
        %v744 = vpack.c.b16 %v621, %v618
        %v745 = vpack.c.b16 %v622, %v619
        %v746 = vpack.c.b16 %v623, %v620
        %v747 = vpack.c.b16 %v627, %v624
        %v748 = vpack.c.b16 %v628, %v625
        %v749 = vpack.c.b16 %v629, %v626
        %v750 = vpack.c.b16 %v633, %v630
        %v751 = vpack.c.b16 %v634, %v631
        %v752 = vpack.c.b16 %v635, %v632
        %v753 = vpack.c.b16 %v639, %v636
        %v754 = vpack.c.b16 %v640, %v637
        %v755 = vpack.c.b16 %v641, %v638
        %v756 = vpack.c.b16 %v645, %v642
        %v757 = vpack.c.b16 %v646, %v643
        %v758 = vpack.c.b16 %v647, %v644
        %v759 = vpack.c.b16 %v651, %v648
        %v760 = vpack.c.b16 %v652, %v649
        %v761 = vpack.c.b16 %v653, %v650
        %v762 = vpack.c.b16 %v657, %v654
        %v763 = vpack.c.b16 %v658, %v655
        %v764 = vpack.c.b16 %v659, %v656
        %v765 = vpack.c.b16 %v663, %v660
        %v766 = vpack.c.b16 %v664, %v661
        %v767 = vpack.c.b16 %v665, %v662
        %v768 = vpack.c.b16 %v669, %v666
        %v769 = vpack.c.b16 %v670, %v667
        %v770 = vpack.c.b16 %v671, %v668
        %v771 = vpack.c.b16 %v675, %v672
        %v772 = vpack.c.b16 %v676, %v673
        %v773 = vpack.c.b16 %v677, %v674
        %870 = vmatprep.subr.bf16.mxu0 %v700
        %871 = vmatpush1.bf16.msra.mxu0 %v699
        %872 = vmatprep.subr.bf16.mxu0 %v697
        %873 = vmatpush1.bf16.msra.mxu0 %v696
        %874 = vmatprep.subr.bf16.mxu0 %v694
        %875 = vmatpush1.bf16.msra.mxu0 %v693
        %876 = vmatprep.subr.bf16.mxu0 %v691
        %877 = vmatpush1.bf16.msra.mxu0 %v690
        %878 = vmatprep.subr.bf16.mxu0 %v688
        %879 = vmatpush1.bf16.msra.mxu0 %v687
        %880 = vmatprep.subr.bf16.mxu0 %v685
        %881 = vmatpush1.bf16.msra.mxu0 %v684
        %882 = vmatprep.subr.bf16.mxu0 %v682
        %883 = vmatpush1.bf16.msra.mxu0 %v681
        %884 = vmatprep.subr.bf16.mxu0 %v679
        %885 = vmatpush1.bf16.msra.mxu0 %v678
        %886 = vmatprep.subr.bf16.mxu0 %v724
        %887 = vmatpush2.bf16.msra.mxu0 %v723
        %888 = vmatprep.subr.bf16.mxu0 %v721
        %889 = vmatpush2.bf16.msra.mxu0 %v720
        %890 = vmatprep.subr.bf16.mxu0 %v718
        %891 = vmatpush2.bf16.msra.mxu0 %v717
        %892 = vmatprep.subr.bf16.mxu0 %v715
        %893 = vmatpush2.bf16.msra.mxu0 %v714
        %894 = vmatprep.subr.bf16.mxu0 %v712
        %895 = vmatpush2.bf16.msra.mxu0 %v711
        %896 = vmatprep.subr.bf16.mxu0 %v709
        %897 = vmatpush2.bf16.msra.mxu0 %v708
        %898 = vmatprep.subr.bf16.mxu0 %v706
        %899 = vmatpush2.bf16.msra.mxu0 %v705
        %900 = vmatprep.subr.bf16.mxu0 %v703
        %901 = vmatpush2.bf16.msra.mxu0 %v702
        %902 = vmatprep.mubr.bf16.mxu0 %v351
        %903 = vmatmul.mubr.bf16.gmra.mxu0 %v350
        %v904 = vpop.f32.mrf.mxu0
        %v905 = vadd.f32 0.0, %v904
        %v906 = vpop.f32.mrf.mxu0
        %v907 = vadd.f32 0.0, %v906
        %v908 = vpop.f32.mrf.mxu0
        %v909 = vpop.f32.mrf.mxu0
        %910 = vdwg.mxu0
        %911 = vmatprep.subr.bf16.mxu0 %v748
        %912 = vmatpush1.bf16.msra.mxu0 %v747
        %913 = vmatprep.subr.bf16.mxu0 %v745
        %914 = vmatpush1.bf16.msra.mxu0 %v744
        %915 = vmatprep.subr.bf16.mxu0 %v742
        %916 = vmatpush1.bf16.msra.mxu0 %v741
        %917 = vmatprep.subr.bf16.mxu0 %v739
        %918 = vmatpush1.bf16.msra.mxu0 %v738
        %919 = vmatprep.subr.bf16.mxu0 %v736
        %920 = vmatpush1.bf16.msra.mxu0 %v735
        %921 = vmatprep.subr.bf16.mxu0 %v733
        %922 = vmatpush1.bf16.msra.mxu0 %v732
        %923 = vmatprep.subr.bf16.mxu0 %v730
        %924 = vmatpush1.bf16.msra.mxu0 %v729
        %925 = vmatprep.subr.bf16.mxu0 %v727
        %926 = vmatpush1.bf16.msra.mxu0 %v726
        %927 = vmatprep.subr.bf16.mxu0 %v772
        %928 = vmatpush2.bf16.msra.mxu0 %v771
        %929 = vmatprep.subr.bf16.mxu0 %v769
        %930 = vmatpush2.bf16.msra.mxu0 %v768
        %931 = vmatprep.subr.bf16.mxu0 %v766
        %932 = vmatpush2.bf16.msra.mxu0 %v765
        %933 = vmatprep.subr.bf16.mxu0 %v763
        %934 = vmatpush2.bf16.msra.mxu0 %v762
        %935 = vmatprep.subr.bf16.mxu0 %v760
        %936 = vmatpush2.bf16.msra.mxu0 %v759
        %937 = vmatprep.subr.bf16.mxu0 %v757
        %938 = vmatpush2.bf16.msra.mxu0 %v756
        %939 = vmatprep.subr.bf16.mxu0 %v754
        %940 = vmatpush2.bf16.msra.mxu0 %v753
        %941 = vmatprep.subr.bf16.mxu0 %v751
        %942 = vmatpush2.bf16.msra.mxu0 %v750
        %943 = vmatprep.mubr.bf16.mxu0 %v353
        %944 = vmatmul.mubr.bf16.gmra.mxu0 %v352
        %v945 = vpop.f32.mrf.mxu0
        %v946 = vadd.f32 %v905, %v945
        %v947 = vpop.f32.mrf.mxu0
        %v948 = vadd.f32 %v907, %v947
        %v949 = vpop.f32.mrf.mxu0
        %v950 = vpop.f32.mrf.mxu0
        %951 = vdwg.mxu0
        %952 = vmatprep.subr.bf16.mxu0 0
        %953 = vmatpush1.bf16.msra.mxu0 %v701
        %954 = vmatprep.subr.bf16.mxu0 0
        %955 = vmatpush1.bf16.msra.mxu0 %v698
        %956 = vmatprep.subr.bf16.mxu0 0
        %957 = vmatpush1.bf16.msra.mxu0 %v695
        %958 = vmatprep.subr.bf16.mxu0 0
        %959 = vmatpush1.bf16.msra.mxu0 %v692
        %960 = vmatprep.subr.bf16.mxu0 0
        %961 = vmatpush1.bf16.msra.mxu0 %v689
        %962 = vmatprep.subr.bf16.mxu0 0
        %963 = vmatpush1.bf16.msra.mxu0 %v686
        %964 = vmatprep.subr.bf16.mxu0 0
        %965 = vmatpush1.bf16.msra.mxu0 %v683
        %966 = vmatprep.subr.bf16.mxu0 0
        %967 = vmatpush1.bf16.msra.mxu0 %v680
        %968 = vmatprep.subr.bf16.mxu0 0
        %969 = vmatpush2.bf16.msra.mxu0 %v725
        %970 = vmatprep.subr.bf16.mxu0 0
        %971 = vmatpush2.bf16.msra.mxu0 %v722
        %972 = vmatprep.subr.bf16.mxu0 0
        %973 = vmatpush2.bf16.msra.mxu0 %v719
        %974 = vmatprep.subr.bf16.mxu0 0
        %975 = vmatpush2.bf16.msra.mxu0 %v716
        %976 = vmatprep.subr.bf16.mxu0 0
        %977 = vmatpush2.bf16.msra.mxu0 %v713
        %978 = vmatprep.subr.bf16.mxu0 0
        %979 = vmatpush2.bf16.msra.mxu0 %v710
        %980 = vmatprep.subr.bf16.mxu0 0
        %981 = vmatpush2.bf16.msra.mxu0 %v707
        %982 = vmatprep.subr.bf16.mxu0 0
        %983 = vmatpush2.bf16.msra.mxu0 %v704
        %984 = vmatprep.mubr.bf16.mxu0 %v351
        %985 = vmatmul.mubr.bf16.gmra.mxu0 %v350
        %v986 = vpop.f32.mrf.mxu0
        %v987 = vadd.f32 0.0, %v986
        %v988 = vpop.f32.mrf.mxu0
        %v989 = vpop.f32.mrf.mxu0
        %v990 = vpop.f32.mrf.mxu0
        %991 = vdwg.mxu0
        %992 = vmatprep.subr.bf16.mxu0 0
        %993 = vmatpush1.bf16.msra.mxu0 %v749
        %994 = vmatprep.subr.bf16.mxu0 0
        %995 = vmatpush1.bf16.msra.mxu0 %v746
        %996 = vmatprep.subr.bf16.mxu0 0
        %997 = vmatpush1.bf16.msra.mxu0 %v743
        %998 = vmatprep.subr.bf16.mxu0 0
        %999 = vmatpush1.bf16.msra.mxu0 %v740
        %1000 = vmatprep.subr.bf16.mxu0 0
        %1001 = vmatpush1.bf16.msra.mxu0 %v737
        %1002 = vmatprep.subr.bf16.mxu0 0
        %1003 = vmatpush1.bf16.msra.mxu0 %v734
        %1004 = vmatprep.subr.bf16.mxu0 0
        %1005 = vmatpush1.bf16.msra.mxu0 %v731
        %1006 = vmatprep.subr.bf16.mxu0 0
        %1007 = vmatpush1.bf16.msra.mxu0 %v728
        %1008 = vmatprep.subr.bf16.mxu0 0
        %1009 = vmatpush2.bf16.msra.mxu0 %v773
        %1010 = vmatprep.subr.bf16.mxu0 0
        %1011 = vmatpush2.bf16.msra.mxu0 %v770
        %1012 = vmatprep.subr.bf16.mxu0 0
        %1013 = vmatpush2.bf16.msra.mxu0 %v767
        %1014 = vmatprep.subr.bf16.mxu0 0
        %1015 = vmatpush2.bf16.msra.mxu0 %v764
        %1016 = vmatprep.subr.bf16.mxu0 0
        %1017 = vmatpush2.bf16.msra.mxu0 %v761
        %1018 = vmatprep.subr.bf16.mxu0 0
        %1019 = vmatpush2.bf16.msra.mxu0 %v758
        %1020 = vmatprep.subr.bf16.mxu0 0
        %1021 = vmatpush2.bf16.msra.mxu0 %v755
        %1022 = vmatprep.subr.bf16.mxu0 0
        %1023 = vmatpush2.bf16.msra.mxu0 %v752
        %1024 = vmatprep.mubr.bf16.mxu0 %v353
        %1025 = vmatmul.mubr.bf16.gmra.mxu0 %v352
        %v1026 = vpop.f32.mrf.mxu0
        %v1027 = vadd.f32 %v987, %v1026
        %v1028 = vpop.f32.mrf.mxu0
        %v1029 = vpop.f32.mrf.mxu0
        %v1030 = vpop.f32.mrf.mxu0
        %1031 = vdwg.mxu0
        %v1032 = vrot.slane %v946, 4
        %v1033 = vadd.f32 %v946, %v1032
        %v1034 = vrot.slane %v1033, 2
        %v1035 = vadd.f32 %v1033, %v1034
        %v1036 = vrot.slane %v1035, 1
        %v1037 = vadd.f32 %v1035, %v1036
        %v1038 = vrot.slane %v948, 4
        %v1039 = vadd.f32 %v948, %v1038
        %v1040 = vrot.slane %v1039, 2
        %v1041 = vadd.f32 %v1039, %v1040
        %v1042 = vrot.slane %v1041, 1
        %v1043 = vadd.f32 %v1041, %v1042
        %v1044 = vrot.slane %v1027, 4
        %v1045 = vadd.f32 %v1027, %v1044
        %v1046 = vrot.slane %v1045, 2
        %v1047 = vadd.f32 %v1045, %v1046
        %v1048 = vrot.slane %v1047, 1
        %v1049 = vadd.f32 %v1047, %v1048
        %v1050 = vmul.f32 %v946, %v946
        %v1051 = vmul.f32 %v948, %v948
        %v1052 = vmul.f32 %v1027, %v1027
        %v1053 = vrot.slane %v1050, 4
        %v1054 = vadd.f32 %v1050, %v1053
        %v1055 = vrot.slane %v1054, 2
        %v1056 = vadd.f32 %v1054, %v1055
        %v1057 = vrot.slane %v1056, 1
        %v1058 = vadd.f32 %v1056, %v1057
        %v1059 = vrot.slane %v1051, 4
        %v1060 = vadd.f32 %v1051, %v1059
        %v1061 = vrot.slane %v1060, 2
        %v1062 = vadd.f32 %v1060, %v1061
        %v1063 = vrot.slane %v1062, 1
        %v1064 = vadd.f32 %v1062, %v1063
        %v1065 = vrot.slane %v1052, 4
        %v1066 = vadd.f32 %v1052, %v1065
        %v1067 = vrot.slane %v1066, 2
        %v1068 = vadd.f32 %v1066, %v1067
        %v1069 = vrot.slane %v1068, 1
        %v1070 = vadd.f32 %v1068, %v1069
        %1071 = vst [vmem:[%s205] sm:$0xff] %v1037
        %1072 = vst [vmem:[%s205 + $0x8] sm:$0xff] %v1043
        %1073 = vst [vmem:[%s205 + $0x10] sm:$0xff] %v1049
        %1074 = vst [vmem:[%s212] sm:$0xff] %v1058
        %1075 = vst [vmem:[%s212 + $0x8] sm:$0xff] %v1064
        %1076 = vst [vmem:[%s212 + $0x10] sm:$0xff] %v1070
        %s1077 = sand.u32 %s80, 1
        %s1078 = scalar_lea.sflag [#allocation4], %s1077
        %s1079 = sand.u32 %s80, 1
        %s1080 = smul.addr %s1079, 24
        %s1081 = scalar_lea.vmem [#allocation7], %s1080
        %s1082 = sand.u32 %s106, 1
        %s1083 = scalar_lea.sflag [#allocation9], %s1082
        %s1084 = sand.u32 %s106, 1
        %s1085 = smul.addr %s1084, 24
        %s1086 = scalar_lea.vmem [#allocation8], %s1085
        // Predicated region
        $region37: #{tpu_custom_call.1} parent=27 // pred_check
          %p1087 = pneg %p90
        $region38: #{tpu_custom_call.1} parent=27 // pred_check_branch
          %1089 = sbr.rel (%p1087) target = $region40
        $region39: #{tpu_custom_call.1} parent=27 // pred_region
          %s1091 = ssub.s32 384, 384
          %1092 = vsyncadd %s1078, %s1091
          %s1093 = smul.addr %s25, 3
          %s1094 = smul.addr %s1093, 128
          %s1095 = scalar_lea.hbm %s2, %s1094
          %s1097 = sshll.u32 %s1081, 4
          %s1098 = int_to_ptr.vmem [resolvable:$true] %s1097
          %1100 = dma.vmem_to_hbm [thread:$0]  %s1098, 384, %s1095, %s1078
        $region40: #{tpu_custom_call.1} parent=27 // pred_fallthru
          _
        // Predicated region
        $region41: #{tpu_custom_call.1} parent=27 // pred_check
          %p1101 = pneg %p116
        $region42: #{tpu_custom_call.1} parent=27 // pred_check_branch
          %1103 = sbr.rel (%p1101) target = $region44
        $region43: #{tpu_custom_call.1} parent=27 // pred_region
          %s1105 = ssub.s32 384, 384
          %1106 = vsyncadd %s1083, %s1105
          %s1107 = smul.addr %s25, 3
          %s1108 = smul.addr %s1107, 128
          %s1109 = scalar_lea.hbm %s3, %s1108
          %s1111 = sshll.u32 %s1086, 4
          %s1112 = int_to_ptr.vmem [resolvable:$true] %s1111
          %1114 = dma.vmem_to_hbm [thread:$0]  %s1112, 384, %s1109, %s1083
        $region44: #{tpu_custom_call.1} parent=27 // pred_fallthru
          _
      $region28: #{tpu_custom_call.1} parent=5 // pred_fallthru
        _
      %p1115 = scmp.le.s32.totalorder 2, %s20
      // Predicated region
      $region45: #{tpu_custom_call.1} parent=5 // pred_check
        %p1116 = pneg %p1115
      $region46: #{tpu_custom_call.1} parent=5 // pred_check_branch
        %1118 = sbr.rel (%p1116) target = $region48
      $region47: #{tpu_custom_call.1} parent=5 // pred_region
        %s1119 = ssub.s32 %s20, 2
        // Predicated region
        $region49: #{tpu_custom_call.1} parent=47 // pred_check
          %p1120 = pneg %p96
        $region50: #{tpu_custom_call.1} parent=47 // pred_check_branch
          %1122 = sbr.rel (%p1120) target = $region52
        $region51: #{tpu_custom_call.1} parent=47 // pred_region
          %s1123 = sand.u32 %s81, 1
          %s1124 = scalar_lea.sflag [#allocation4], %s1123
          %s1125 = sand.u32 %s81, 1
          %s1126 = smul.addr %s1125, 24
          %s1127 = scalar_lea.vmem [#allocation7], %s1126
          %1128 = dma.done %s1124, 384
        $region52: #{tpu_custom_call.1} parent=47 // pred_fallthru
          _
        // Predicated region
        $region53: #{tpu_custom_call.1} parent=47 // pred_check
          %p1129 = pneg %p122
        $region54: #{tpu_custom_call.1} parent=47 // pred_check_branch
          %1131 = sbr.rel (%p1129) target = $region56
        $region55: #{tpu_custom_call.1} parent=47 // pred_region
          %s1132 = sand.u32 %s107, 1
          %s1133 = scalar_lea.sflag [#allocation9], %s1132
          %s1134 = sand.u32 %s107, 1
          %s1135 = smul.addr %s1134, 24
          %s1136 = scalar_lea.vmem [#allocation8], %s1135
          %1137 = dma.done %s1133, 384
        $region56: #{tpu_custom_call.1} parent=47 // pred_fallthru
          _
      $region48: #{tpu_custom_call.1} parent=5 // pred_fallthru
        _
    $region6: #{tpu_custom_call.1} parent=1 // loop_footer
      %s24 = sadd.s32 1, %s20
    $region7: #{tpu_custom_call.1} parent=1 // loop_footer_branch
      %19 = sbr.rel target = $region3
    $region8: #{tpu_custom_call.1} parent=1 // loop_exit
      _
    %1138 = vsyncpa [#allocation3], 1
    %s1139 = scalar_lea.sflag [#allocation3], 1
    %1140 = vsyncpa %s1139, 1
    %1141 = vsyncpa [#allocation6], 1
    %1142 = vsyncpa [#allocation4], 1
    %s1143 = scalar_lea.sflag [#allocation4], 1
    %1144 = vsyncpa %s1143, 1
    %1145 = vsyncpa [#allocation9], 1
    %s1146 = scalar_lea.sflag [#allocation9], 1
    %1147 = vsyncpa %s1146, 1

</llo_original>
